<compile_context>
chip_gen: v7x
topology: tpu7x:2x2x1
jax: 0.10.0
libtpu: 0.0.40
codegen_flags: <defaults>
</compile_context>

<pallas_src>
import functools

import jax
import jax.numpy as jnp
from jax.experimental import pallas as pl
from jax.experimental.pallas import tpu as pltpu


def _round_up(x, m):
    return ((x + m - 1) // m) * m


# ----------------------------- Pallas kernel --------------------------------
def cnn_head_kernel(x_ref, wconv_ref, lin_w_ref, lin_b_ref,
                    subobj_ref, w1_ref, w2_ref, com_b_ref,
                    scores_ref, *, S, K, s_chunk):
    """Conv1d('same') -> seq max-pool -> tanh(Linear) -> split Linear.

    x_ref      : (Bb, S+2*(K//2), C_in) bf16  'same'-padded conv input
    wconv_ref  : (K, C_in, C_out)       bf16  conv weight, one (C_in,C_out) per tap
    lin_w_ref  : (C_out, H)             bf16
    lin_b_ref  : (1, H)                 f32   (= lin_b + conv_b @ lin_w, bias folded)
    subobj_ref : (Bb, 6*inp_size)       bf16  subject/object entity features
    w1_ref     : (6*inp_size, T)        bf16  com_linear weight, subobj rows, T=128 padded
    w2_ref     : (H, T)                 bf16  com_linear weight, hidden rows
    com_b_ref  : (1, T)                 f32   com bias (padded lanes zero)
    scores_ref : (Bb, T)                f32   lane-dense logits (first num_tags real)
    """
    Bb = x_ref.shape[0]
    C_in = x_ref.shape[2]
    C_out = wconv_ref.shape[2]

    # Conv weight taps (each (C_in, C_out)) stay resident for the whole block.
    w_taps = [wconv_ref[k] for k in range(K)]

    # 1+2) Conv1d + F.max_pool1d over the sequence as a running max over
    #      S-chunks, so the (rows, C_out) f32 accumulator (lane-padded to 128)
    #      stays bounded regardless of S / block_b.  The im2col is implicit:
    #      each tap k is a static sublane-shifted view of the padded input.
    pooled = None
    for s0 in range(0, S, s_chunk):            # static loop (S is a Python int)
        ts = min(s_chunk, S - s0)
        acc = jnp.zeros((Bb * ts, C_out), jnp.float32)
        for k in range(K):                     # K tiny accumulating MXU matmuls
            xk = x_ref[:, s0 + k:s0 + k + ts, :].reshape(Bb * ts, C_in)
            acc = acc + jnp.dot(xk, w_taps[k],
                                preferred_element_type=jnp.float32)
        chunk_max = jnp.max(acc.reshape(Bb, ts, C_out), axis=1)   # (Bb, C_out)
        pooled = chunk_max if pooled is None else jnp.maximum(pooled, chunk_max)

    # 3) tanh(sent_linear(pooled)).  Per-channel conv bias commutes with the
    #    sequence max and was folded into lin_b in the wrapper.  bf16 MXU
    #    operands, f32 accumulation; tanh stays f32 (EUP).
    hidden = jnp.tanh(
        jnp.dot(pooled.astype(jnp.bfloat16), lin_w_ref[...],
                preferred_element_type=jnp.float32) + lin_b_ref[...])   # (Bb, H)

    # 4) com_linear with pre-split weight: no lane-axis concat inside the kernel.
    scores_ref[...] = (
        jnp.dot(subobj_ref[...], w1_ref[...], preferred_element_type=jnp.float32)
        + jnp.dot(hidden.astype(jnp.bfloat16), w2_ref[...],
                  preferred_element_type=jnp.float32)
        + com_b_ref[...])                                               # (Bb, T)


def cnn_head(x_conv, conv_w, lin_w, lin_b_eff, subobj, w1, w2, com_b_pad,
             *, S, K, s_chunk=8):
    B, Sp, C_in = x_conv.shape
    C_out = conv_w.shape[2]
    H = lin_w.shape[1]
    F_sub = subobj.shape[1]
    T_pad = com_b_pad.shape[1]
    s_chunk = min(s_chunk, S)

    # ---- Block sizing (memory-bound head: biggest block that fits a
    #      conservative VMEM budget; >=2 blocks when B is large enough so the
    #      "parallel" axis shards across both v7x TensorCores). --------------
    row_bytes = (2 * 2 * Sp * C_in        # x block (bf16, double-buffered)
                 + 2 * 2 * F_sub          # subobj block (bf16, double-buffered)
                 + 2 * 4 * T_pad          # scores block (f32, double-buffered)
                 + s_chunk * 128 * 4      # conv acc chunk (C_out lane-padded)
                 + 2 * 128 * 4)           # pooled + hidden (lane-padded)
    VMEM_BUDGET = 24 << 20                # safe on v5e/v6e (128 MiB) and v7x (64 MiB)
    if B <= 16:
        block_b = B                       # single block, no batch padding
    else:
        block_b = min(4096, _round_up(-(-B // 2), 8))
        while block_b > 8 and block_b * row_bytes > VMEM_BUDGET:
            block_b = _round_up(block_b // 2, 8)
    B_pad = _round_up(B, block_b)
    if B_pad != B:
        # TODO(synk): a smaller trailing block would avoid these padded HBM
        #             bytes for awkward batch sizes.
        x_conv = jnp.pad(x_conv, ((0, B_pad - B), (0, 0), (0, 0)))
        subobj = jnp.pad(subobj, ((0, B_pad - B), (0, 0)))
    grid = (B_pad // block_b,)

    flops = 2 * B_pad * (S * K * C_in * C_out + C_out * H
                         + F_sub * T_pad + H * T_pad)
    bytes_accessed = sum(int(a.size) * a.dtype.itemsize
                         for a in (x_conv, conv_w, lin_w, lin_b_eff,
                                   subobj, w1, w2, com_b_pad))
    bytes_accessed += B_pad * T_pad * 4
    cost = pl.CostEstimate(flops=flops, transcendentals=B_pad * H,
                           bytes_accessed=bytes_accessed)

    vmem_limit = int(min(48 << 20, max(32 << 20, 2 * block_b * row_bytes)))

    kernel = functools.partial(cnn_head_kernel, S=S, K=K, s_chunk=s_chunk)
    scores_pad = pl.pallas_call(
        kernel,
        out_shape=jax.ShapeDtypeStruct((B_pad, T_pad), jnp.float32),
        grid=grid,
        in_specs=[
            pl.BlockSpec((block_b, Sp, C_in), lambda i: (i, 0, 0)),
            pl.BlockSpec((K, C_in, C_out), lambda i: (0, 0, 0)),
            pl.BlockSpec((C_out, H), lambda i: (0, 0)),
            pl.BlockSpec((1, H), lambda i: (0, 0)),
            pl.BlockSpec((block_b, F_sub), lambda i: (i, 0)),
            pl.BlockSpec((F_sub, T_pad), lambda i: (0, 0)),
            pl.BlockSpec((H, T_pad), lambda i: (0, 0)),
            pl.BlockSpec((1, T_pad), lambda i: (0, 0)),
        ],
        out_specs=pl.BlockSpec((block_b, T_pad), lambda i: (i, 0)),
        compiler_params=pltpu.CompilerParams(
            dimension_semantics=("parallel",),
            vmem_limit_bytes=vmem_limit),
        cost_estimate=cost,
    )(x_conv, conv_w, lin_w, lin_b_eff, subobj, w1, w2, com_b_pad)
    return scores_pad[:B]


# ------------------------------ JAX glue -------------------------------------
def _entity_features(embed, spans, seq_len):
    """Vectorized mean-over-span + left/right neighbor embeddings.

    Matches the torch semantics: `start >= 0` is always true, so the left
    neighbor is embed[start - 1], which for start == 0 wraps to the LAST row
    (torch negative indexing).  The right neighbor is zero when end + 1 falls
    off the sequence.
    """
    E = embed.shape[-1]

    def one(emb_b, span):
        start, end = span[0], span[1]
        pos = jnp.arange(seq_len)
        mask = ((pos >= start) & (pos <= end)).astype(emb_b.dtype)
        count = jnp.maximum(end - start + 1, 1).astype(emb_b.dtype)
        ent = (emb_b * mask[:, None]).sum(axis=0) / count
        left = jnp.take(emb_b, (start - 1) % seq_len, axis=0)
        right = jnp.where(end + 1 < seq_len,
                          jnp.take(emb_b, jnp.minimum(end + 1, seq_len - 1), axis=0),
                          jnp.zeros((E,), emb_b.dtype))
        return jnp.concatenate([ent, left, right])

    return jax.vmap(one)(embed, spans)


def build_features(params, context, subject_idx, object_idx,
                   subject_dis, object_dis, max_inp_len, conv_kernel_size):
    """Embedding gathers + feature concat + weight prep for the Pallas head."""
    B, S = context.shape

    # Embedding lookup (in_dropout is identity at inference).
    embed = params["embedding"][context]                       # (B, S, E)

    # Subject / object entity features.
    subj = _entity_features(embed, subject_idx, S)
    obj = _entity_features(embed, object_idx, S)
    subobj = jnp.concatenate([subj, obj], axis=1)              # (B, 6E)

    # 3-gram word features with zero padding at both sequence ends.
    zpad = jnp.zeros((B, 1, embed.shape[-1]), embed.dtype)
    emb_p = jnp.concatenate([zpad, embed, zpad], axis=1)       # (B, S+2, E)
    word_features = jnp.concatenate(
        [emb_p[:, :-2], emb_p[:, 1:-1], emb_p[:, 2:]], axis=2)  # (B, S, 3E)

    # Position features (distances shifted by max_inp_len before lookup).
    pos_tbl = params["pos_embedding"]
    pos_features = jnp.concatenate(
        [pos_tbl[subject_dis + max_inp_len], pos_tbl[object_dis + max_inp_len]],
        axis=2)                                                 # (B, S, 2*pf)

    sent_features = jnp.concatenate([word_features, pos_features], axis=2)
    # hid_dropout is identity at inference.

    # 'same' conv zero padding of the sequence only -- the im2col (K shifted
    # views) happens inside the kernel, so the dominant HBM stream stays
    # (B, S+2*pad, C_in) instead of (B, S, K*C_in).
    K = conv_kernel_size
    pad = K // 2
    x_conv = jnp.pad(sent_features, ((0, 0), (pad, pad), (0, 0)))

    # Fold the per-channel conv bias into the sent_linear bias (valid because
    # only the max-pool sits between conv and sent_linear):
    #   max_s(conv + b_c) @ W + b = max_s(conv) @ W + (b_c @ W + b).
    lin_b_eff = (params["conv_b"] @ params["lin_w"]
                 + params["lin_b"]).reshape(1, -1).astype(jnp.float32)

    # Split com_linear weight (kills the in-kernel lane-axis concat) and pad
    # the tag axis to 128 lanes for lane-dense stores; the wrapper slices the
    # scores back to num_tags before the decode argmax.
    six_e = subobj.shape[1]
    num_tags = params["com_b"].shape[0]
    T_pad = 128
    w1 = jnp.pad(params["com_w"][:six_e], ((0, 0), (0, T_pad - num_tags)))
    w2 = jnp.pad(params["com_w"][six_e:], ((0, 0), (0, T_pad - num_tags)))
    com_b_pad = jnp.pad(params["com_b"].reshape(1, -1),
                        ((0, 0), (0, T_pad - num_tags))).astype(jnp.float32)

    # bf16 operands for all MXU matmuls (f32 accumulation inside the kernel).
    return (x_conv.astype(jnp.bfloat16),
            params["conv_w"].astype(jnp.bfloat16),     # (K, C_in, C_out)
            params["lin_w"].astype(jnp.bfloat16),
            lin_b_eff,
            subobj.astype(jnp.bfloat16),
            w1.astype(jnp.bfloat16),
            w2.astype(jnp.bfloat16),
            com_b_pad)


@functools.partial(jax.jit, static_argnames=("max_inp_len", "conv_kernel_size"))
def cnn_forward(params, context, subject_idx, object_idx, subject_dis, object_dis,
                *, max_inp_len, conv_kernel_size):
    """decode=True forward pass. Returns (pred, scores)."""
    ops = build_features(params, context, subject_idx, object_idx,
                         subject_dis, object_dis, max_inp_len, conv_kernel_size)
    S = context.shape[1]
    scores_pad = cnn_head(*ops, S=S, K=conv_kernel_size)
    num_tags = params["com_b"].shape[0]
    scores = scores_pad[:, :num_tags]
    # decode branch: softmax is monotone, so argmax(softmax(x)) == argmax(x).
    pred = jnp.argmax(scores, axis=1).astype(jnp.int32)
    return pred, scores


# ---------------------- references for the sanity check ----------------------
def head_mirror_bf16(x_conv_bf, conv_w_bf, lin_w_bf, lin_b_eff,
                     subobj_bf, w1_bf, w2_bf, com_b_pad, *, S, K):
    """Pure-JAX mirror of the kernel (same dtypes / same folding). Tight check."""
    acc = sum(jnp.einsum("bsc,co->bso", x_conv_bf[:, k:k + S, :], conv_w_bf[k],
                         preferred_element_type=jnp.float32) for k in range(K))
    pooled = jnp.max(acc, axis=1)
    hidden = jnp.tanh(jnp.dot(pooled.astype(jnp.bfloat16), lin_w_bf,
                              preferred_element_type=jnp.float32) + lin_b_eff)
    return (jnp.dot(subobj_bf, w1_bf, preferred_element_type=jnp.float32)
            + jnp.dot(hidden.astype(jnp.bfloat16), w2_bf,
                      preferred_element_type=jnp.float32) + com_b_pad)


def cnn_forward_f32_reference(params, context, subject_idx, object_idx,
                              subject_dis, object_dis, max_inp_len, K):
    """Full-f32 reference mirroring the torch graph (no folding, no split)."""
    B, S = context.shape
    embed = params["embedding"][context]
    subj = _entity_features(embed, subject_idx, S)
    obj = _entity_features(embed, object_idx, S)
    zpad = jnp.zeros((B, 1, embed.shape[-1]), embed.dtype)
    emb_p = jnp.concatenate([zpad, embed, zpad], axis=1)
    word = jnp.concatenate([emb_p[:, :-2], emb_p[:, 1:-1], emb_p[:, 2:]], axis=2)
    pos_tbl = params["pos_embedding"]
    pos = jnp.concatenate([pos_tbl[subject_dis + max_inp_len],
                           pos_tbl[object_dis + max_inp_len]], axis=2)
    sent = jnp.concatenate([word, pos], axis=2)
    pad = K // 2
    sp = jnp.pad(sent, ((0, 0), (pad, pad), (0, 0)))
    conv = sum(jnp.einsum("bsc,co->bso", sp[:, k:k + S, :], params["conv_w"][k])
               for k in range(K)) + params["conv_b"]
    pooled = jnp.max(conv, axis=1)
    hidden = jnp.tanh(pooled @ params["lin_w"] + params["lin_b"])
    com = jnp.concatenate([subj, obj, hidden], axis=1)
    scores = com @ params["com_w"] + params["com_b"]
    return jnp.argmax(scores, axis=1).astype(jnp.int32), scores


# ------------------------------- main ----------------------------------------
if __name__ == "__main__":
    # Model hyper-parameters (small, consistent with the module's __init__).
    num_tags = 5
    vocab_size = 50
    embed_size = 8
    max_inp_len = 16
    pf_embed_size = 4
    conv_kernel_num = 16
    conv_kernel_size = 3
    linear_hidden_size = 16
    B, S = 2, max_inp_len

    inp_size = embed_size                       # use_bigram=False
    conv_in = inp_size * 3 + pf_embed_size * 2  # 32
    com_in = inp_size * 3 * 2 + linear_hidden_size  # 64

    key = jax.random.PRNGKey(0)
    ks = jax.random.split(key, 12)
    params = {
        "embedding":     jax.random.normal(ks[0], (vocab_size, embed_size), jnp.float32) * 0.1,
        "pos_embedding": jax.random.normal(ks[1], (max_inp_len * 2, pf_embed_size), jnp.float32) * 0.1,
        # Conv1d weight (out, in, K) in torch -> stored as (K, C_in, C_out).
        "conv_w": jnp.transpose(
            jax.random.normal(ks[2], (conv_kernel_num, conv_in, conv_kernel_size),
                              jnp.float32) * 0.1, (2, 1, 0)),
        "conv_b": jax.random.normal(ks[3], (conv_kernel_num,), jnp.float32) * 0.1,
        # Linear weight (out, in) in torch -> stored as (in, out).
        "lin_w": jnp.transpose(
            jax.random.normal(ks[4], (linear_hidden_size, conv_kernel_num),
                              jnp.float32) * 0.1),
        "lin_b": jax.random.normal(ks[5], (linear_hidden_size,), jnp.float32) * 0.1,
        "com_w": jnp.transpose(
            jax.random.normal(ks[6], (num_tags, com_in), jnp.float32) * 0.1),
        "com_b": jax.random.normal(ks[7], (num_tags,), jnp.float32) * 0.1,
    }

    # Deterministic example inputs.
    context = jax.random.randint(ks[8], (B, S), 0, vocab_size, jnp.int32)
    subject_idx = jnp.array([[1, 3], [2, 5]], dtype=jnp.int32)
    object_idx = jnp.array([[6, 8], [9, 11]], dtype=jnp.int32)
    subject_dis = jax.random.randint(ks[9], (B, S), -max_inp_len, max_inp_len, jnp.int32)
    object_dis = jax.random.randint(ks[10], (B, S), -max_inp_len, max_inp_len, jnp.int32)

    pred, scores = cnn_forward(params, context, subject_idx, object_idx,
                               subject_dis, object_dis,
                               max_inp_len=max_inp_len,
                               conv_kernel_size=conv_kernel_size)
    pred, scores = jax.block_until_ready((pred, scores))
    assert scores.shape == (B, num_tags)
    assert pred.shape == (B,)

    # (a) Tight check vs. a pure-JAX mirror using the exact kernel dtypes.
    ops = build_features(params, context, subject_idx, object_idx,
                         subject_dis, object_dis, max_inp_len, conv_kernel_size)
    mirror = head_mirror_bf16(*ops, S=S, K=conv_kernel_size)[:, :num_tags]
    assert jnp.allclose(scores, mirror, rtol=1e-4, atol=1e-5), \
        "scores mismatch vs same-dtype mirror"

    # (b) Loose check vs. a full-f32 reference that mirrors the torch graph
    #     (catches bf16-cast / bias-folding / weight-split errors).
    ref_pred, ref_scores = cnn_forward_f32_reference(
        params, context, subject_idx, object_idx, subject_dis, object_dis,
        max_inp_len, conv_kernel_size)
    assert jnp.allclose(scores, ref_scores, rtol=5e-2, atol=5e-3), \
        "scores mismatch vs f32 reference beyond bf16 tolerance"

    # (c) Decode agreement: predictions must match the f32 reference unless the
    #     f32 top-2 gap is itself within bf16 tolerance.
    rows = jnp.arange(B)
    gap = ref_scores[rows, ref_pred] - ref_scores[rows, pred]
    assert bool(jnp.all((pred == ref_pred) | (gap <= 5e-3))), \
        "pred mismatch vs f32 reference beyond bf16 tolerance"

    print("KERNEL_OK")
</pallas_src>

<mosaic_0001>
module attributes {stable_mosaic.version = 11 : i64} {
  func.func @cnn_head_kernel(%arg0: i32, %arg1: memref<2x18x32xbf16, #tpu.memory_space<vmem>>, %arg2: memref<3x32x16xbf16, #tpu.memory_space<vmem>>, %arg3: memref<16x16xbf16, #tpu.memory_space<vmem>>, %arg4: memref<1x16xf32, #tpu.memory_space<vmem>>, %arg5: memref<2x48xbf16, #tpu.memory_space<vmem>>, %arg6: memref<48x128xbf16, #tpu.memory_space<vmem>>, %arg7: memref<16x128xbf16, #tpu.memory_space<vmem>>, %arg8: memref<1x128xf32, #tpu.memory_space<vmem>>, %arg9: memref<2x128xf32, #tpu.memory_space<vmem>>) attributes {dimension_semantics = [#tpu.dimension_semantics<parallel>], iteration_bounds = array<i64: 1>, scalar_prefetch = 0 : i64, scratch_operands = 0 : i64, tpu.core_type = #tpu.core_type<tc>, window_params = [{transform_indices = @transform_0, window_bounds = array<i64: 2, 18, 32>}, {pipeline_mode = #tpu.pipeline_mode<synchronous>, transform_indices = @transform_1, window_bounds = array<i64: 3, 32, 16>}, {pipeline_mode = #tpu.pipeline_mode<synchronous>, transform_indices = @transform_2, window_bounds = array<i64: 16, 16>}, {pipeline_mode = #tpu.pipeline_mode<synchronous>, transform_indices = @transform_3, window_bounds = array<i64: 1, 16>}, {transform_indices = @transform_4, window_bounds = array<i64: 2, 48>}, {pipeline_mode = #tpu.pipeline_mode<synchronous>, transform_indices = @transform_5, window_bounds = array<i64: 48, 128>}, {pipeline_mode = #tpu.pipeline_mode<synchronous>, transform_indices = @transform_6, window_bounds = array<i64: 16, 128>}, {pipeline_mode = #tpu.pipeline_mode<synchronous>, transform_indices = @transform_7, window_bounds = array<i64: 1, 128>}, {transform_indices = @transform_8, window_bounds = array<i64: 2, 128>}]} {
    %c0 = arith.constant 0 : index
    %c0_0 = arith.constant 0 : index
    %c0_1 = arith.constant 0 : index
    %0 = vector.load %arg2[%c0, %c0_0, %c0_1] : memref<3x32x16xbf16, #tpu.memory_space<vmem>>, vector<1x32x16xbf16>
    %1 = vector.shape_cast %0 : vector<1x32x16xbf16> to vector<32x16xbf16>
    %c1 = arith.constant 1 : index
    %c0_2 = arith.constant 0 : index
    %c0_3 = arith.constant 0 : index
    %2 = vector.load %arg2[%c1, %c0_2, %c0_3] : memref<3x32x16xbf16, #tpu.memory_space<vmem>>, vector<1x32x16xbf16>
    %3 = vector.shape_cast %2 : vector<1x32x16xbf16> to vector<32x16xbf16>
    %c2 = arith.constant 2 : index
    %c0_4 = arith.constant 0 : index
    %c0_5 = arith.constant 0 : index
    %4 = vector.load %arg2[%c2, %c0_4, %c0_5] : memref<3x32x16xbf16, #tpu.memory_space<vmem>>, vector<1x32x16xbf16>
    %5 = vector.shape_cast %4 : vector<1x32x16xbf16> to vector<32x16xbf16>
    %cst = arith.constant 0.000000e+00 : f32
    %6 = vector.broadcast %cst : f32 to vector<16x16xf32>
    %c0_6 = arith.constant 0 : index
    %c0_7 = arith.constant 0 : index
    %c0_8 = arith.constant 0 : index
    %7 = vector.load %arg1[%c0_6, %c0_7, %c0_8] : memref<2x18x32xbf16, #tpu.memory_space<vmem>>, vector<2x8x32xbf16>
    %8 = vector.shape_cast %7 : vector<2x8x32xbf16> to vector<16x32xbf16>
    %cst_9 = arith.constant dense<0.000000e+00> : vector<16x16xf32>
    %9 = tpu.matmul %8, %1, %cst_9 {dimension_numbers = #tpu.dot_dimension_numbers<[1], [0], [0], [1], [0, 0, 1, 1], [], []>} : vector<16x32xbf16>, vector<32x16xbf16>, vector<16x16xf32> -> vector<16x16xf32>
    %10 = arith.addf %6, %9 : vector<16x16xf32>
    %c0_10 = arith.constant 0 : index
    %c1_11 = arith.constant 1 : index
    %c0_12 = arith.constant 0 : index
    %11 = vector.load %arg1[%c0_10, %c1_11, %c0_12] : memref<2x18x32xbf16, #tpu.memory_space<vmem>>, vector<2x8x32xbf16>
    %12 = vector.shape_cast %11 : vector<2x8x32xbf16> to vector<16x32xbf16>
    %cst_13 = arith.constant dense<0.000000e+00> : vector<16x16xf32>
    %13 = tpu.matmul %12, %3, %cst_13 {dimension_numbers = #tpu.dot_dimension_numbers<[1], [0], [0], [1], [0, 0, 1, 1], [], []>} : vector<16x32xbf16>, vector<32x16xbf16>, vector<16x16xf32> -> vector<16x16xf32>
    %14 = arith.addf %10, %13 : vector<16x16xf32>
    %c0_14 = arith.constant 0 : index
    %c2_15 = arith.constant 2 : index
    %c0_16 = arith.constant 0 : index
    %15 = vector.load %arg1[%c0_14, %c2_15, %c0_16] : memref<2x18x32xbf16, #tpu.memory_space<vmem>>, vector<2x8x32xbf16>
    %16 = vector.shape_cast %15 : vector<2x8x32xbf16> to vector<16x32xbf16>
    %cst_17 = arith.constant dense<0.000000e+00> : vector<16x16xf32>
    %17 = tpu.matmul %16, %5, %cst_17 {dimension_numbers = #tpu.dot_dimension_numbers<[1], [0], [0], [1], [0, 0, 1, 1], [], []>} : vector<16x32xbf16>, vector<32x16xbf16>, vector<16x16xf32> -> vector<16x16xf32>
    %18 = arith.addf %14, %17 : vector<16x16xf32>
    %19 = vector.shape_cast %18 : vector<16x16xf32> to vector<2x8x16xf32>
    %cst_18 = arith.constant dense<0xFF800000> : vector<2x16xf32>
    %20 = vector.multi_reduction <maximumf>, %19, %cst_18 [1] : vector<2x8x16xf32> to vector<2x16xf32>
    %cst_19 = arith.constant 0.000000e+00 : f32
    %21 = vector.broadcast %cst_19 : f32 to vector<16x16xf32>
    %c0_20 = arith.constant 0 : index
    %c8 = arith.constant 8 : index
    %c0_21 = arith.constant 0 : index
    %22 = vector.load %arg1[%c0_20, %c8, %c0_21] : memref<2x18x32xbf16, #tpu.memory_space<vmem>>, vector<2x8x32xbf16>
    %23 = vector.shape_cast %22 : vector<2x8x32xbf16> to vector<16x32xbf16>
    %cst_22 = arith.constant dense<0.000000e+00> : vector<16x16xf32>
    %24 = tpu.matmul %23, %1, %cst_22 {dimension_numbers = #tpu.dot_dimension_numbers<[1], [0], [0], [1], [0, 0, 1, 1], [], []>} : vector<16x32xbf16>, vector<32x16xbf16>, vector<16x16xf32> -> vector<16x16xf32>
    %25 = arith.addf %21, %24 : vector<16x16xf32>
    %c0_23 = arith.constant 0 : index
    %c9 = arith.constant 9 : index
    %c0_24 = arith.constant 0 : index
    %26 = vector.load %arg1[%c0_23, %c9, %c0_24] : memref<2x18x32xbf16, #tpu.memory_space<vmem>>, vector<2x8x32xbf16>
    %27 = vector.shape_cast %26 : vector<2x8x32xbf16> to vector<16x32xbf16>
    %cst_25 = arith.constant dense<0.000000e+00> : vector<16x16xf32>
    %28 = tpu.matmul %27, %3, %cst_25 {dimension_numbers = #tpu.dot_dimension_numbers<[1], [0], [0], [1], [0, 0, 1, 1], [], []>} : vector<16x32xbf16>, vector<32x16xbf16>, vector<16x16xf32> -> vector<16x16xf32>
    %29 = arith.addf %25, %28 : vector<16x16xf32>
    %c0_26 = arith.constant 0 : index
    %c10 = arith.constant 10 : index
    %c0_27 = arith.constant 0 : index
    %30 = vector.load %arg1[%c0_26, %c10, %c0_27] : memref<2x18x32xbf16, #tpu.memory_space<vmem>>, vector<2x8x32xbf16>
    %31 = vector.shape_cast %30 : vector<2x8x32xbf16> to vector<16x32xbf16>
    %cst_28 = arith.constant dense<0.000000e+00> : vector<16x16xf32>
    %32 = tpu.matmul %31, %5, %cst_28 {dimension_numbers = #tpu.dot_dimension_numbers<[1], [0], [0], [1], [0, 0, 1, 1], [], []>} : vector<16x32xbf16>, vector<32x16xbf16>, vector<16x16xf32> -> vector<16x16xf32>
    %33 = arith.addf %29, %32 : vector<16x16xf32>
    %34 = vector.shape_cast %33 : vector<16x16xf32> to vector<2x8x16xf32>
    %cst_29 = arith.constant dense<0xFF800000> : vector<2x16xf32>
    %35 = vector.multi_reduction <maximumf>, %34, %cst_29 [1] : vector<2x8x16xf32> to vector<2x16xf32>
    %36 = arith.maximumf %20, %35 : vector<2x16xf32>
    %37 = arith.truncf %36 : vector<2x16xf32> to vector<2x16xbf16>
    %c0_30 = arith.constant 0 : index
    %c0_31 = arith.constant 0 : index
    %38 = vector.load %arg3[%c0_30, %c0_31] : memref<16x16xbf16, #tpu.memory_space<vmem>>, vector<16x16xbf16>
    %cst_32 = arith.constant dense<0.000000e+00> : vector<2x16xf32>
    %39 = tpu.matmul %37, %38, %cst_32 {dimension_numbers = #tpu.dot_dimension_numbers<[1], [0], [0], [1], [0, 0, 1, 1], [], []>} : vector<2x16xbf16>, vector<16x16xbf16>, vector<2x16xf32> -> vector<2x16xf32>
    %c0_33 = arith.constant 0 : index
    %c0_34 = arith.constant 0 : index
    %40 = vector.load %arg4[%c0_33, %c0_34] : memref<1x16xf32, #tpu.memory_space<vmem>>, vector<1x16xf32>
    %41 = vector.broadcast %40 : vector<1x16xf32> to vector<2x16xf32>
    %42 = arith.addf %39, %41 : vector<2x16xf32>
    %43 = math.tanh %42 : vector<2x16xf32>
    %c0_35 = arith.constant 0 : index
    %c0_36 = arith.constant 0 : index
    %44 = vector.load %arg5[%c0_35, %c0_36] : memref<2x48xbf16, #tpu.memory_space<vmem>>, vector<2x48xbf16>
    %c0_37 = arith.constant 0 : index
    %c0_38 = arith.constant 0 : index
    %45 = vector.load %arg6[%c0_37, %c0_38] : memref<48x128xbf16, #tpu.memory_space<vmem>>, vector<48x128xbf16>
    %cst_39 = arith.constant dense<0.000000e+00> : vector<2x128xf32>
    %46 = tpu.matmul %44, %45, %cst_39 {dimension_numbers = #tpu.dot_dimension_numbers<[1], [0], [0], [1], [0, 0, 1, 1], [], []>} : vector<2x48xbf16>, vector<48x128xbf16>, vector<2x128xf32> -> vector<2x128xf32>
    %47 = arith.truncf %43 : vector<2x16xf32> to vector<2x16xbf16>
    %c0_40 = arith.constant 0 : index
    %c0_41 = arith.constant 0 : index
    %48 = vector.load %arg7[%c0_40, %c0_41] : memref<16x128xbf16, #tpu.memory_space<vmem>>, vector<16x128xbf16>
    %cst_42 = arith.constant dense<0.000000e+00> : vector<2x128xf32>
    %49 = tpu.matmul %47, %48, %cst_42 {dimension_numbers = #tpu.dot_dimension_numbers<[1], [0], [0], [1], [0, 0, 1, 1], [], []>} : vector<2x16xbf16>, vector<16x128xbf16>, vector<2x128xf32> -> vector<2x128xf32>
    %50 = arith.addf %46, %49 : vector<2x128xf32>
    %c0_43 = arith.constant 0 : index
    %c0_44 = arith.constant 0 : index
    %51 = vector.load %arg8[%c0_43, %c0_44] : memref<1x128xf32, #tpu.memory_space<vmem>>, vector<1x128xf32>
    %52 = vector.broadcast %51 : vector<1x128xf32> to vector<2x128xf32>
    %53 = arith.addf %50, %52 : vector<2x128xf32>
    %c0_45 = arith.constant 0 : index
    %c0_46 = arith.constant 0 : index
    %54 = vector.load %arg9[%c0_45, %c0_46] : memref<2x128xf32, #tpu.memory_space<vmem>>, vector<2x128xf32>
    tpu.vector_store %arg9[%c0_45, %c0_46], %53 {strides = array<i32>} : memref<2x128xf32, #tpu.memory_space<vmem>>, vector<2x128xf32>,
    return
  }
  func.func @transform_0(%arg0: i32) -> (i32, i32, i32) {
    %c0_i32 = arith.constant 0 : i32
    %c0_i32_0 = arith.constant 0 : i32
    %c0_i32_1 = arith.constant 0 : i32
    return %arg0, %c0_i32, %c0_i32_0 : i32, i32, i32
  }
  func.func @transform_1(%arg0: i32) -> (i32, i32, i32) {
    %c0_i32 = arith.constant 0 : i32
    %c0_i32_0 = arith.constant 0 : i32
    %c0_i32_1 = arith.constant 0 : i32
    %c0_i32_2 = arith.constant 0 : i32
    return %c0_i32, %c0_i32_0, %c0_i32_1 : i32, i32, i32
  }
  func.func @transform_2(%arg0: i32) -> (i32, i32) {
    %c0_i32 = arith.constant 0 : i32
    %c0_i32_0 = arith.constant 0 : i32
    %c0_i32_1 = arith.constant 0 : i32
    return %c0_i32, %c0_i32_0 : i32, i32
  }
  func.func @transform_3(%arg0: i32) -> (i32, i32) {
    %c0_i32 = arith.constant 0 : i32
    %c0_i32_0 = arith.constant 0 : i32
    %c0_i32_1 = arith.constant 0 : i32
    return %c0_i32, %c0_i32_0 : i32, i32
  }
  func.func @transform_4(%arg0: i32) -> (i32, i32) {
    %c0_i32 = arith.constant 0 : i32
    %c0_i32_0 = arith.constant 0 : i32
    return %arg0, %c0_i32 : i32, i32
  }
  func.func @transform_5(%arg0: i32) -> (i32, i32) {
    %c0_i32 = arith.constant 0 : i32
    %c0_i32_0 = arith.constant 0 : i32
    %c0_i32_1 = arith.constant 0 : i32
    return %c0_i32, %c0_i32_0 : i32, i32
  }
  func.func @transform_6(%arg0: i32) -> (i32, i32) {
    %c0_i32 = arith.constant 0 : i32
    %c0_i32_0 = arith.constant 0 : i32
    %c0_i32_1 = arith.constant 0 : i32
    return %c0_i32, %c0_i32_0 : i32, i32
  }
  func.func @transform_7(%arg0: i32) -> (i32, i32) {
    %c0_i32 = arith.constant 0 : i32
    %c0_i32_0 = arith.constant 0 : i32
    %c0_i32_1 = arith.constant 0 : i32
    return %c0_i32, %c0_i32_0 : i32, i32
  }
  func.func @transform_8(%arg0: i32) -> (i32, i32) {
    %c0_i32 = arith.constant 0 : i32
    %c0_i32_0 = arith.constant 0 : i32
    return %arg0, %c0_i32 : i32, i32
  }
}

</mosaic_0001>

<llo_original>
// kernel: cnn_forward.1
$region0: #{cnn_forward.1}
  #allocation0 [shape = 'u32[]', space=smem, size = 0x4, offset = 0x4, fixed_abs, tag = 'smem constant byte address 0x4 - core index']
  #allocation1 [shape = 'u32[144,128]{1,0:T(1,128)}', space=vmem, size = 0x12000, scoped, tag = 'internal scratch']
  %s0 = inlined_call_operand.vmem [shape: bf16[2,18,32], index: 0, kind: input, shape index: {}]
  %s1 = inlined_call_operand.vmem [shape: bf16[3,32,16], index: 1, kind: input, shape index: {}]
  %s2 = inlined_call_operand.vmem [shape: bf16[16,16], index: 2, kind: input, shape index: {}]
  %s3 = inlined_call_operand.vmem [shape: f32[1,16], index: 3, kind: input, shape index: {}]
  %s4 = inlined_call_operand.vmem [shape: bf16[2,48], index: 4, kind: input, shape index: {}]
  %s5 = inlined_call_operand.vmem [shape: bf16[48,128], index: 5, kind: input, shape index: {}]
  %s6 = inlined_call_operand.vmem [shape: bf16[16,128], index: 6, kind: input, shape index: {}]
  %s7 = inlined_call_operand.vmem [shape: f32[1,128], index: 7, kind: input, shape index: {}]
  %s8 = inlined_call_operand.vmem [shape: f32[2,128], index: 8, kind: output, shape index: {}]
  %s9 = sld [smem:[#allocation0]]
  $region42: #{cnn_forward.1} parent=0
    _
  %s11 = ssub.s32 1, %s9
  %s12 = scalar_select 0, %s11, %s9
  // Predicated region
  $region2: #{cnn_forward.1} parent=0 // pred_check
    _
  $region3: #{cnn_forward.1} parent=0 // pred_check_branch
    %14 = sbr.rel (0) target = $region5
  $region4: #{cnn_forward.1} parent=0 // pred_region
    _
  $region5: #{cnn_forward.1} parent=0 // pred_fallthru
    _
  // Predicated region
  $region6: #{cnn_forward.1} parent=0 // pred_check
    _
  $region7: #{cnn_forward.1} parent=0 // pred_check_branch
    %16 = sbr.rel (0) target = $region9
  $region8: #{cnn_forward.1} parent=0 // pred_region
    _
  $region9: #{cnn_forward.1} parent=0 // pred_fallthru
    _
  // Predicated region
  $region10: #{cnn_forward.1} parent=0 // pred_check
    _
  $region11: #{cnn_forward.1} parent=0 // pred_check_branch
    %18 = sbr.rel (0) target = $region13
  $region12: #{cnn_forward.1} parent=0 // pred_region
    _
  $region13: #{cnn_forward.1} parent=0 // pred_fallthru
    _
  // Predicated region
  $region14: #{cnn_forward.1} parent=0 // pred_check
    _
  $region15: #{cnn_forward.1} parent=0 // pred_check_branch
    %20 = sbr.rel (0) target = $region17
  $region16: #{cnn_forward.1} parent=0 // pred_region
    _
  $region17: #{cnn_forward.1} parent=0 // pred_fallthru
    _
  // Predicated region
  $region18: #{cnn_forward.1} parent=0 // pred_check
    _
  $region19: #{cnn_forward.1} parent=0 // pred_check_branch
    %22 = sbr.rel (0) target = $region21
  $region20: #{cnn_forward.1} parent=0 // pred_region
    _
  $region21: #{cnn_forward.1} parent=0 // pred_fallthru
    _
  // Predicated region
  $region22: #{cnn_forward.1} parent=0 // pred_check
    _
  $region23: #{cnn_forward.1} parent=0 // pred_check_branch
    %24 = sbr.rel (0) target = $region25
  $region24: #{cnn_forward.1} parent=0 // pred_region
    _
  $region25: #{cnn_forward.1} parent=0 // pred_fallthru
    _
  // Predicated region
  $region26: #{cnn_forward.1} parent=0 // pred_check
    _
  $region27: #{cnn_forward.1} parent=0 // pred_check_branch
    %26 = sbr.rel (0) target = $region29
  $region28: #{cnn_forward.1} parent=0 // pred_region
    _
  $region29: #{cnn_forward.1} parent=0 // pred_fallthru
    _
  // Predicated region
  $region30: #{cnn_forward.1} parent=0 // pred_check
    _
  $region31: #{cnn_forward.1} parent=0 // pred_check_branch
    %28 = sbr.rel (0) target = $region33
  $region32: #{cnn_forward.1} parent=0 // pred_region
    _
  $region33: #{cnn_forward.1} parent=0 // pred_fallthru
    _
  %v30 = vld [vmem:[%s1] sm:$0xf]
  %v31 = vld [vmem:[%s1 + $0x4] sm:$0xf]
  %v32 = vld [vmem:[%s1 + $0x8] sm:$0xf]
  %v33 = vld [vmem:[%s1 + $0xc] sm:$0xf]
  %s34 = scalar_lea.vmem %s1, 16
  %v35 = vld [vmem:[%s34] sm:$0xf]
  %v36 = vld [vmem:[%s34 + $0x4] sm:$0xf]
  %v37 = vld [vmem:[%s34 + $0x8] sm:$0xf]
  %v38 = vld [vmem:[%s34 + $0xc] sm:$0xf]
  %s39 = scalar_lea.vmem %s1, 32
  %v40 = vld [vmem:[%s39] sm:$0xf]
  %v41 = vld [vmem:[%s39 + $0x4] sm:$0xf]
  %v42 = vld [vmem:[%s39 + $0x8] sm:$0xf]
  %v43 = vld [vmem:[%s39 + $0xc] sm:$0xf]
  %v44 = vld [vmem:[%s0] sm:$0xf]
  %v45 = vld [vmem:[%s0 + $0xc] sm:$0xf]
  %v46 = vld [vmem:[%s0 + $0x4] sm:$0x1]
  %v47 = vld [vmem:[%s0 + $0x10] sm:$0x1]
  %vm48 = vsmask.f32 3328
  %vm49 = vsmask.f32 7440
  %vm50 = vmor %vm48, %vm49
  %v52 = vshrl.u32 %v44, 16
  %v54 = vrot.slane %v52, 4
  %v55 = vshll.u32 %v44, 16
  %v57 = vrot.slane %v55, 5
  %v58 = vor.u32 %v54, %v57
  %v59 = vrot.slane %v58, 4
  %v61 = vshll.u32 %v46, 16
  %v63 = vrot.slane %v61, 5
  %v64 = vsel %vm50, %v59, %v63
  %v66 = vshrl.u32 %v45, 16
  %v68 = vrot.slane %v66, 4
  %v69 = vshll.u32 %v45, 16
  %v71 = vrot.slane %v69, 5
  %v72 = vor.u32 %v68, %v71
  %v73 = vrot.slane %v72, 4
  %v75 = vshll.u32 %v47, 16
  %v77 = vrot.slane %v75, 5
  %v78 = vsel %vm50, %v73, %v77
  %v79 = vunpack.c.l.b16 %v64
  %v80 = vunpack.c.l.b16 %v78
  %v81 = vpack.c.b16 %v80, %v79
  %v86 = vunpack.c.l.b16 %v35
  %v87 = vunpack.c.l.b16 %v36
  %v88 = vunpack.c.l.b16 %v37
  %v89 = vunpack.c.l.b16 %v38
  %v90 = vpack.c.b16 %v87, %v86
  %v91 = vpack.c.b16 %v89, %v88
  %vm94 = vcmask 261120
  %v96 = vsel %vm94, %v81, 0
  %98 = vmatprep.subr.bf16.mxu0 0
  %99 = vmatpush1.bf16.msra.mxu0 %v90
  %100 = vmatprep.subr.bf16.mxu0 0
  %101 = vmatpush1.bf16.msra.mxu0 %v91
  %102 = vmatprep.subr.bf16.mxu0 0
  %103 = vmatpush1.bf16.msra.mxu0 0
  %104 = vmatprep.subr.bf16.mxu0 0
  %105 = vmatpush1.bf16.msra.mxu0 0
  %106 = vmatprep.subr.bf16.mxu0 0
  %107 = vmatpush1.bf16.msra.mxu0 0
  %108 = vmatprep.subr.bf16.mxu0 0
  %109 = vmatpush1.bf16.msra.mxu0 0
  %110 = vmatprep.subr.bf16.mxu0 0
  %111 = vmatpush1.bf16.msra.mxu0 0
  %112 = vmatprep.subr.bf16.mxu0 0
  %113 = vmatpush1.bf16.msra.mxu0 0
  %114 = vmatprep.subr.bf16.mxu0 0
  %115 = vmatpush1.bf16.msra.mxu0 0
  %116 = vmatprep.subr.bf16.mxu0 0
  %117 = vmatpush1.bf16.msra.mxu0 0
  %118 = vmatprep.subr.bf16.mxu0 0
  %119 = vmatpush1.bf16.msra.mxu0 0
  %120 = vmatprep.subr.bf16.mxu0 0
  %121 = vmatpush1.bf16.msra.mxu0 0
  %122 = vmatprep.subr.bf16.mxu0 0
  %123 = vmatpush1.bf16.msra.mxu0 0
  %124 = vmatprep.subr.bf16.mxu0 0
  %125 = vmatpush1.bf16.msra.mxu0 0
  %126 = vmatprep.subr.bf16.mxu0 0
  %127 = vmatpush1.bf16.msra.mxu0 0
  %128 = vmatprep.subr.bf16.mxu0 0
  %129 = vmatpush1.bf16.msra.mxu0 0
  %130 = vmatprep.mubr.bf16.mxu0 0
  %131 = vmatmul.mubr.bf16.gmra.mrb[0].mxu0 %v96
  %v132 = vpop.f32.mrb[0].mxu0
  %v133 = vadd.f32 0.0, %v132
  %v134 = vpop.f32.mrb[0].mxu0
  %v135 = vpop.f32.mrb[0].mxu0
  %v136 = vadd.f32 0.0, %v135
  %v137 = vpop.f32.mrb[0].mxu0
  %138 = vdwg.mxu0
  %v141 = vunpack.c.l.b16 %v44
  %v142 = vunpack.c.l.b16 %v45
  %v143 = vpack.c.b16 %v142, %v141
  %v148 = vunpack.c.l.b16 %v30
  %v149 = vunpack.c.l.b16 %v31
  %v150 = vunpack.c.l.b16 %v32
  %v151 = vunpack.c.l.b16 %v33
  %v152 = vpack.c.b16 %v149, %v148
  %v153 = vpack.c.b16 %v151, %v150
  %v157 = vsel %vm94, %v143, 0
  %159 = vmatprep.subr.bf16.mxu0 0
  %160 = vmatpush1.bf16.msra.mxu0 %v152
  %161 = vmatprep.subr.bf16.mxu0 0
  %162 = vmatpush1.bf16.msra.mxu0 %v153
  %163 = vmatprep.subr.bf16.mxu0 0
  %164 = vmatpush1.bf16.msra.mxu0 0
  %165 = vmatprep.subr.bf16.mxu0 0
  %166 = vmatpush1.bf16.msra.mxu0 0
  %167 = vmatprep.subr.bf16.mxu0 0
  %168 = vmatpush1.bf16.msra.mxu0 0
  %169 = vmatprep.subr.bf16.mxu0 0
  %170 = vmatpush1.bf16.msra.mxu0 0
  %171 = vmatprep.subr.bf16.mxu0 0
  %172 = vmatpush1.bf16.msra.mxu0 0
  %173 = vmatprep.subr.bf16.mxu0 0
  %174 = vmatpush1.bf16.msra.mxu0 0
  %175 = vmatprep.subr.bf16.mxu0 0
  %176 = vmatpush1.bf16.msra.mxu0 0
  %177 = vmatprep.subr.bf16.mxu0 0
  %178 = vmatpush1.bf16.msra.mxu0 0
  %179 = vmatprep.subr.bf16.mxu0 0
  %180 = vmatpush1.bf16.msra.mxu0 0
  %181 = vmatprep.subr.bf16.mxu0 0
  %182 = vmatpush1.bf16.msra.mxu0 0
  %183 = vmatprep.subr.bf16.mxu0 0
  %184 = vmatpush1.bf16.msra.mxu0 0
  %185 = vmatprep.subr.bf16.mxu0 0
  %186 = vmatpush1.bf16.msra.mxu0 0
  %187 = vmatprep.subr.bf16.mxu0 0
  %188 = vmatpush1.bf16.msra.mxu0 0
  %189 = vmatprep.subr.bf16.mxu0 0
  %190 = vmatpush1.bf16.msra.mxu0 0
  %191 = vmatprep.mubr.bf16.mxu0 0
  %192 = vmatmul.mubr.bf16.gmra.mrb[0].mxu0 %v157
  %v193 = vpop.f32.mrb[0].mxu0
  %v194 = vadd.f32 %v133, %v193
  %v195 = vpop.f32.mrb[0].mxu0
  %v196 = vpop.f32.mrb[0].mxu0
  %v197 = vadd.f32 %v136, %v196
  %v198 = vpop.f32.mrb[0].mxu0
  %199 = vdwg.mxu0
  %v200 = vld [vmem:[%s0] sm:$0xe]
  %v201 = vld [vmem:[%s0 + $0xc] sm:$0xe]
  %vm206 = vcmask 1042432
  %vm207 = vcmask 1046532
  %vm208 = vmor %vm206, %vm207
  %v209 = vrot.slane %v200, 5
  %v210 = vrot.slane %v209, 4
  %v211 = vrot.slane %v46, 5
  %v212 = vsel %vm208, %v210, %v211
  %v213 = vrot.slane %v201, 5
  %v214 = vrot.slane %v213, 4
  %v215 = vrot.slane %v47, 5
  %v216 = vsel %vm208, %v214, %v215
  %v217 = vunpack.c.l.b16 %v212
  %v218 = vunpack.c.l.b16 %v216
  %v219 = vpack.c.b16 %v218, %v217
  %v224 = vunpack.c.l.b16 %v40
  %v225 = vunpack.c.l.b16 %v41
  %v226 = vunpack.c.l.b16 %v42
  %v227 = vunpack.c.l.b16 %v43
  %v228 = vpack.c.b16 %v225, %v224
  %v229 = vpack.c.b16 %v227, %v226
  %v233 = vsel %vm94, %v219, 0
  %235 = vmatprep.subr.bf16.mxu0 0
  %236 = vmatpush1.bf16.msra.mxu0 %v228
  %237 = vmatprep.subr.bf16.mxu0 0
  %238 = vmatpush1.bf16.msra.mxu0 %v229
  %239 = vmatprep.subr.bf16.mxu0 0
  %240 = vmatpush1.bf16.msra.mxu0 0
  %241 = vmatprep.subr.bf16.mxu0 0
  %242 = vmatpush1.bf16.msra.mxu0 0
  %243 = vmatprep.subr.bf16.mxu0 0
  %244 = vmatpush1.bf16.msra.mxu0 0
  %245 = vmatprep.subr.bf16.mxu0 0
  %246 = vmatpush1.bf16.msra.mxu0 0
  %247 = vmatprep.subr.bf16.mxu0 0
  %248 = vmatpush1.bf16.msra.mxu0 0
  %249 = vmatprep.subr.bf16.mxu0 0
  %250 = vmatpush1.bf16.msra.mxu0 0
  %251 = vmatprep.subr.bf16.mxu0 0
  %252 = vmatpush1.bf16.msra.mxu0 0
  %253 = vmatprep.subr.bf16.mxu0 0
  %254 = vmatpush1.bf16.msra.mxu0 0
  %255 = vmatprep.subr.bf16.mxu0 0
  %256 = vmatpush1.bf16.msra.mxu0 0
  %257 = vmatprep.subr.bf16.mxu0 0
  %258 = vmatpush1.bf16.msra.mxu0 0
  %259 = vmatprep.subr.bf16.mxu0 0
  %260 = vmatpush1.bf16.msra.mxu0 0
  %261 = vmatprep.subr.bf16.mxu0 0
  %262 = vmatpush1.bf16.msra.mxu0 0
  %263 = vmatprep.subr.bf16.mxu0 0
  %264 = vmatpush1.bf16.msra.mxu0 0
  %265 = vmatprep.subr.bf16.mxu0 0
  %266 = vmatpush1.bf16.msra.mxu0 0
  %267 = vmatprep.mubr.bf16.mxu0 0
  %268 = vmatmul.mubr.bf16.gmra.mrb[0].mxu0 %v233
  %v269 = vpop.f32.mrb[0].mxu0
  %v270 = vadd.f32 0.0, %v269
  %v271 = vpop.f32.mrb[0].mxu0
  %v272 = vpop.f32.mrb[0].mxu0
  %v273 = vadd.f32 0.0, %v272
  %v274 = vpop.f32.mrb[0].mxu0
  %275 = vdwg.mxu0
  %v276 = vadd.f32 %v194, %v270
  %v277 = vadd.f32 %v197, %v273
  %vm278 = vcmask 130048
  %v279 = vsel %vm278, %v276, -inf
  %v280 = vrot.slane %v279, 4
  %v281 = vmax.f32 %v279, %v280
  %v282 = vrot.slane %v281, 2
  %v283 = vmax.f32 %v281, %v282
  %v284 = vrot.slane %v283, 1
  %v285 = vmax.f32 %v283, %v284
  %v286 = vsel %vm278, %v277, -inf
  %v287 = vrot.slane %v286, 4
  %v288 = vmax.f32 %v286, %v287
  %v289 = vrot.slane %v288, 2
  %v290 = vmax.f32 %v288, %v289
  %v291 = vrot.slane %v290, 1
  %v292 = vmax.f32 %v290, %v291
  %v293 = vld [vmem:[%s0 + $0x4] sm:$0xf]
  %v294 = vld [vmem:[%s0 + $0x10] sm:$0xf]
  %v295 = vld [vmem:[%s0 + $0x8] sm:$0x1]
  %v296 = vld [vmem:[%s0 + $0x14] sm:$0x1]
  %v298 = vshrl.u32 %v293, 16
  %v300 = vrot.slane %v298, 4
  %v301 = vshll.u32 %v293, 16
  %v303 = vrot.slane %v301, 5
  %v304 = vor.u32 %v300, %v303
  %v305 = vrot.slane %v304, 4
  %v307 = vshll.u32 %v295, 16
  %v309 = vrot.slane %v307, 5
  %v310 = vsel %vm50, %v305, %v309
  %v312 = vshrl.u32 %v294, 16
  %v314 = vrot.slane %v312, 4
  %v315 = vshll.u32 %v294, 16
  %v317 = vrot.slane %v315, 5
  %v318 = vor.u32 %v314, %v317
  %v319 = vrot.slane %v318, 4
  %v321 = vshll.u32 %v296, 16
  %v323 = vrot.slane %v321, 5
  %v324 = vsel %vm50, %v319, %v323
  %v325 = vunpack.c.l.b16 %v310
  %v326 = vunpack.c.l.b16 %v324
  %v327 = vpack.c.b16 %v326, %v325
  %v329 = vsel %vm94, %v327, 0
  %331 = vmatprep.subr.bf16.mxu0 0
  %332 = vmatpush1.bf16.msra.mxu0 %v90
  %333 = vmatprep.subr.bf16.mxu0 0
  %334 = vmatpush1.bf16.msra.mxu0 %v91
  %335 = vmatprep.subr.bf16.mxu0 0
  %336 = vmatpush1.bf16.msra.mxu0 0
  %337 = vmatprep.subr.bf16.mxu0 0
  %338 = vmatpush1.bf16.msra.mxu0 0
  %339 = vmatprep.subr.bf16.mxu0 0
  %340 = vmatpush1.bf16.msra.mxu0 0
  %341 = vmatprep.subr.bf16.mxu0 0
  %342 = vmatpush1.bf16.msra.mxu0 0
  %343 = vmatprep.subr.bf16.mxu0 0
  %344 = vmatpush1.bf16.msra.mxu0 0
  %345 = vmatprep.subr.bf16.mxu0 0
  %346 = vmatpush1.bf16.msra.mxu0 0
  %347 = vmatprep.subr.bf16.mxu0 0
  %348 = vmatpush1.bf16.msra.mxu0 0
  %349 = vmatprep.subr.bf16.mxu0 0
  %350 = vmatpush1.bf16.msra.mxu0 0
  %351 = vmatprep.subr.bf16.mxu0 0
  %352 = vmatpush1.bf16.msra.mxu0 0
  %353 = vmatprep.subr.bf16.mxu0 0
  %354 = vmatpush1.bf16.msra.mxu0 0
  %355 = vmatprep.subr.bf16.mxu0 0
  %356 = vmatpush1.bf16.msra.mxu0 0
  %357 = vmatprep.subr.bf16.mxu0 0
  %358 = vmatpush1.bf16.msra.mxu0 0
  %359 = vmatprep.subr.bf16.mxu0 0
  %360 = vmatpush1.bf16.msra.mxu0 0
  %361 = vmatprep.subr.bf16.mxu0 0
  %362 = vmatpush1.bf16.msra.mxu0 0
  %363 = vmatprep.mubr.bf16.mxu0 0
  %364 = vmatmul.mubr.bf16.gmra.mrb[0].mxu0 %v329
  %v365 = vpop.f32.mrb[0].mxu0
  %v366 = vadd.f32 0.0, %v365
  %v367 = vpop.f32.mrb[0].mxu0
  %v368 = vpop.f32.mrb[0].mxu0
  %v369 = vadd.f32 0.0, %v368
  %v370 = vpop.f32.mrb[0].mxu0
  %371 = vdwg.mxu0
  %v374 = vunpack.c.l.b16 %v293
  %v375 = vunpack.c.l.b16 %v294
  %v376 = vpack.c.b16 %v375, %v374
  %v378 = vsel %vm94, %v376, 0
  %380 = vmatprep.subr.bf16.mxu0 0
  %381 = vmatpush1.bf16.msra.mxu0 %v152
  %382 = vmatprep.subr.bf16.mxu0 0
  %383 = vmatpush1.bf16.msra.mxu0 %v153
  %384 = vmatprep.subr.bf16.mxu0 0
  %385 = vmatpush1.bf16.msra.mxu0 0
  %386 = vmatprep.subr.bf16.mxu0 0
  %387 = vmatpush1.bf16.msra.mxu0 0
  %388 = vmatprep.subr.bf16.mxu0 0
  %389 = vmatpush1.bf16.msra.mxu0 0
  %390 = vmatprep.subr.bf16.mxu0 0
  %391 = vmatpush1.bf16.msra.mxu0 0
  %392 = vmatprep.subr.bf16.mxu0 0
  %393 = vmatpush1.bf16.msra.mxu0 0
  %394 = vmatprep.subr.bf16.mxu0 0
  %395 = vmatpush1.bf16.msra.mxu0 0
  %396 = vmatprep.subr.bf16.mxu0 0
  %397 = vmatpush1.bf16.msra.mxu0 0
  %398 = vmatprep.subr.bf16.mxu0 0
  %399 = vmatpush1.bf16.msra.mxu0 0
  %400 = vmatprep.subr.bf16.mxu0 0
  %401 = vmatpush1.bf16.msra.mxu0 0
  %402 = vmatprep.subr.bf16.mxu0 0
  %403 = vmatpush1.bf16.msra.mxu0 0
  %404 = vmatprep.subr.bf16.mxu0 0
  %405 = vmatpush1.bf16.msra.mxu0 0
  %406 = vmatprep.subr.bf16.mxu0 0
  %407 = vmatpush1.bf16.msra.mxu0 0
  %408 = vmatprep.subr.bf16.mxu0 0
  %409 = vmatpush1.bf16.msra.mxu0 0
  %410 = vmatprep.subr.bf16.mxu0 0
  %411 = vmatpush1.bf16.msra.mxu0 0
  %412 = vmatprep.mubr.bf16.mxu0 0
  %413 = vmatmul.mubr.bf16.gmra.mrb[0].mxu0 %v378
  %v414 = vpop.f32.mrb[0].mxu0
  %v415 = vadd.f32 %v366, %v414
  %v416 = vpop.f32.mrb[0].mxu0
  %v417 = vpop.f32.mrb[0].mxu0
  %v418 = vadd.f32 %v369, %v417
  %v419 = vpop.f32.mrb[0].mxu0
  %420 = vdwg.mxu0
  %v421 = vld [vmem:[%s0 + $0x4] sm:$0xe]
  %v422 = vld [vmem:[%s0 + $0x10] sm:$0xe]
  %v427 = vrot.slane %v421, 5
  %v428 = vrot.slane %v427, 4
  %v429 = vrot.slane %v295, 5
  %v430 = vsel %vm208, %v428, %v429
  %v431 = vrot.slane %v422, 5
  %v432 = vrot.slane %v431, 4
  %v433 = vrot.slane %v296, 5
  %v434 = vsel %vm208, %v432, %v433
  %v435 = vunpack.c.l.b16 %v430
  %v436 = vunpack.c.l.b16 %v434
  %v437 = vpack.c.b16 %v436, %v435
  %v439 = vsel %vm94, %v437, 0
  %441 = vmatprep.subr.bf16.mxu0 0
  %442 = vmatpush1.bf16.msra.mxu0 %v228
  %443 = vmatprep.subr.bf16.mxu0 0
  %444 = vmatpush1.bf16.msra.mxu0 %v229
  %445 = vmatprep.subr.bf16.mxu0 0
  %446 = vmatpush1.bf16.msra.mxu0 0
  %447 = vmatprep.subr.bf16.mxu0 0
  %448 = vmatpush1.bf16.msra.mxu0 0
  %449 = vmatprep.subr.bf16.mxu0 0
  %450 = vmatpush1.bf16.msra.mxu0 0
  %451 = vmatprep.subr.bf16.mxu0 0
  %452 = vmatpush1.bf16.msra.mxu0 0
  %453 = vmatprep.subr.bf16.mxu0 0
  %454 = vmatpush1.bf16.msra.mxu0 0
  %455 = vmatprep.subr.bf16.mxu0 0
  %456 = vmatpush1.bf16.msra.mxu0 0
  %457 = vmatprep.subr.bf16.mxu0 0
  %458 = vmatpush1.bf16.msra.mxu0 0
  %459 = vmatprep.subr.bf16.mxu0 0
  %460 = vmatpush1.bf16.msra.mxu0 0
  %461 = vmatprep.subr.bf16.mxu0 0
  %462 = vmatpush1.bf16.msra.mxu0 0
  %463 = vmatprep.subr.bf16.mxu0 0
  %464 = vmatpush1.bf16.msra.mxu0 0
  %465 = vmatprep.subr.bf16.mxu0 0
  %466 = vmatpush1.bf16.msra.mxu0 0
  %467 = vmatprep.subr.bf16.mxu0 0
  %468 = vmatpush1.bf16.msra.mxu0 0
  %469 = vmatprep.subr.bf16.mxu0 0
  %470 = vmatpush1.bf16.msra.mxu0 0
  %471 = vmatprep.subr.bf16.mxu0 0
  %472 = vmatpush1.bf16.msra.mxu0 0
  %473 = vmatprep.mubr.bf16.mxu0 0
  %474 = vmatmul.mubr.bf16.gmra.mrb[0].mxu0 %v439
  %v475 = vpop.f32.mrb[0].mxu0
  %v476 = vadd.f32 0.0, %v475
  %v477 = vpop.f32.mrb[0].mxu0
  %v478 = vpop.f32.mrb[0].mxu0
  %v479 = vadd.f32 0.0, %v478
  %v480 = vpop.f32.mrb[0].mxu0
  %481 = vdwg.mxu0
  %v482 = vadd.f32 %v415, %v476
  %v483 = vadd.f32 %v418, %v479
  %v484 = vsel %vm278, %v482, -inf
  %v485 = vrot.slane %v484, 4
  %v486 = vmax.f32 %v484, %v485
  %v487 = vrot.slane %v486, 2
  %v488 = vmax.f32 %v486, %v487
  %v489 = vrot.slane %v488, 1
  %v490 = vmax.f32 %v488, %v489
  %v491 = vsel %vm278, %v483, -inf
  %v492 = vrot.slane %v491, 4
  %v493 = vmax.f32 %v491, %v492
  %v494 = vrot.slane %v493, 2
  %v495 = vmax.f32 %v493, %v494
  %v496 = vrot.slane %v495, 1
  %v497 = vmax.f32 %v495, %v496
  %v498 = vmax.f32 %v285, %v490
  %v499 = vmax.f32 %v292, %v497
  %v500 = vpack.c.bf16 %v498, %v498
  %v501 = vpack.c.bf16 %v499, %v499
  %v502 = vld [vmem:[%s2] sm:$0xf]
  %v503 = vld [vmem:[%s2 + $0x4] sm:$0xf]
  %v504 = vld [vmem:[%s3] sm:$0x1]
  %v506 = vlaneseq
  %v507 = vshrl.u32 %v506, 7
  %v508 = vsub.s32 0, %v507
  %v509 = vrot.slane %v504, %v508
  %v513 = vunpack.c.l.b16 %v500
  %v514 = vunpack.c.l.b16 %v501
  %vm515 = vcmask 1041409
  %v516 = vsel %vm515, %v514, %v513
  %v517 = vpack.c.b16 %v516, %v516
  %v520 = vunpack.c.l.b16 %v502
  %v521 = vunpack.c.l.b16 %v503
  %v522 = vpack.c.b16 %v521, %v520
  %v525 = vsel %vm278, %v517, 0
  %527 = vmatprep.subr.bf16.mxu0 0
  %528 = vmatpush1.bf16.msra.mxu0 %v522
  %529 = vmatprep.subr.bf16.mxu0 0
  %530 = vmatpush1.bf16.msra.mxu0 0
  %531 = vmatprep.subr.bf16.mxu0 0
  %532 = vmatpush1.bf16.msra.mxu0 0
  %533 = vmatprep.subr.bf16.mxu0 0
  %534 = vmatpush1.bf16.msra.mxu0 0
  %535 = vmatprep.subr.bf16.mxu0 0
  %536 = vmatpush1.bf16.msra.mxu0 0
  %537 = vmatprep.subr.bf16.mxu0 0
  %538 = vmatpush1.bf16.msra.mxu0 0
  %539 = vmatprep.subr.bf16.mxu0 0
  %540 = vmatpush1.bf16.msra.mxu0 0
  %541 = vmatprep.subr.bf16.mxu0 0
  %542 = vmatpush1.bf16.msra.mxu0 0
  %543 = vmatprep.subr.bf16.mxu0 0
  %544 = vmatpush1.bf16.msra.mxu0 0
  %545 = vmatprep.subr.bf16.mxu0 0
  %546 = vmatpush1.bf16.msra.mxu0 0
  %547 = vmatprep.subr.bf16.mxu0 0
  %548 = vmatpush1.bf16.msra.mxu0 0
  %549 = vmatprep.subr.bf16.mxu0 0
  %550 = vmatpush1.bf16.msra.mxu0 0
  %551 = vmatprep.subr.bf16.mxu0 0
  %552 = vmatpush1.bf16.msra.mxu0 0
  %553 = vmatprep.subr.bf16.mxu0 0
  %554 = vmatpush1.bf16.msra.mxu0 0
  %555 = vmatprep.subr.bf16.mxu0 0
  %556 = vmatpush1.bf16.msra.mxu0 0
  %557 = vmatprep.subr.bf16.mxu0 0
  %558 = vmatpush1.bf16.msra.mxu0 0
  %559 = vmatprep.mubr.bf16.mxu0 0
  %560 = vmatmul.mubr.bf16.gmra.mrb[0].mxu0 %v525
  %v561 = vpop.f32.mrb[0].mxu0
  %v562 = vadd.f32 %v509, %v561
  %v563 = vpop.f32.mrb[0].mxu0
  %v564 = vpop.f32.mrb[0].mxu0
  %v565 = vpop.f32.mrb[0].mxu0
  %566 = vdwg.mxu0
  %v567 = vtanh.pop %v562
  %v568 = vld [vmem:[%s4] sm:$0x1]
  %v569 = vld [vmem:[%s5] sm:$0xf]
  %v570 = vld [vmem:[%s5 + $0x4] sm:$0xf]
  %v571 = vld [vmem:[%s5 + $0x8] sm:$0xf]
  %v572 = vld [vmem:[%s5 + $0xc] sm:$0xf]
  %v573 = vld [vmem:[%s5 + $0x10] sm:$0xf]
  %v574 = vld [vmem:[%s5 + $0x14] sm:$0xf]
  %v575 = vpack.c.bf16 %v567, %v567
  %v576 = vld [vmem:[%s6] sm:$0xf]
  %v577 = vld [vmem:[%s6 + $0x4] sm:$0xf]
  %v580 = vunpack.c.l.b16 %v576
  %v581 = vunpack.c.l.b16 %v577
  %v582 = vpack.c.b16 %v581, %v580
  %v585 = vsel %vm278, %v575, 0
  %587 = vmatprep.subr.bf16.mxu0 0
  %588 = vmatpush1.bf16.msra.mxu0 %v582
  %589 = vmatprep.subr.bf16.mxu0 0
  %590 = vmatpush1.bf16.msra.mxu0 0
  %591 = vmatprep.subr.bf16.mxu0 0
  %592 = vmatpush1.bf16.msra.mxu0 0
  %593 = vmatprep.subr.bf16.mxu0 0
  %594 = vmatpush1.bf16.msra.mxu0 0
  %595 = vmatprep.subr.bf16.mxu0 0
  %596 = vmatpush1.bf16.msra.mxu0 0
  %597 = vmatprep.subr.bf16.mxu0 0
  %598 = vmatpush1.bf16.msra.mxu0 0
  %599 = vmatprep.subr.bf16.mxu0 0
  %600 = vmatpush1.bf16.msra.mxu0 0
  %601 = vmatprep.subr.bf16.mxu0 0
  %602 = vmatpush1.bf16.msra.mxu0 0
  %603 = vmatprep.subr.bf16.mxu0 0
  %604 = vmatpush1.bf16.msra.mxu0 0
  %605 = vmatprep.subr.bf16.mxu0 0
  %606 = vmatpush1.bf16.msra.mxu0 0
  %607 = vmatprep.subr.bf16.mxu0 0
  %608 = vmatpush1.bf16.msra.mxu0 0
  %609 = vmatprep.subr.bf16.mxu0 0
  %610 = vmatpush1.bf16.msra.mxu0 0
  %611 = vmatprep.subr.bf16.mxu0 0
  %612 = vmatpush1.bf16.msra.mxu0 0
  %613 = vmatprep.subr.bf16.mxu0 0
  %614 = vmatpush1.bf16.msra.mxu0 0
  %615 = vmatprep.subr.bf16.mxu0 0
  %616 = vmatpush1.bf16.msra.mxu0 0
  %617 = vmatprep.subr.bf16.mxu0 0
  %618 = vmatpush1.bf16.msra.mxu0 0
  %619 = vmatprep.mubr.bf16.mxu0 0
  %620 = vmatmul.mubr.bf16.gmra.mrb[0].mxu0 %v585
  %v621 = vpop.f32.mrb[0].mxu0
  %v622 = vadd.f32 0.0, %v621
  %v623 = vpop.f32.mrb[0].mxu0
  %v624 = vpop.f32.mrb[0].mxu0
  %v625 = vpop.f32.mrb[0].mxu0
  %626 = vdwg.mxu0
  %v633 = vunpack.c.l.b16 %v569
  %v634 = vunpack.c.l.b16 %v570
  %v635 = vunpack.c.l.b16 %v571
  %v636 = vunpack.c.l.b16 %v572
  %v637 = vunpack.c.l.b16 %v573
  %v638 = vunpack.c.l.b16 %v574
  %v639 = vpack.c.b16 %v634, %v633
  %v640 = vpack.c.b16 %v636, %v635
  %v641 = vpack.c.b16 %v638, %v637
  %vm645 = vcmask 392192
  %v647 = vsel %vm645, %v568, 0
  %649 = vmatprep.subr.bf16.mxu0 0
  %650 = vmatpush1.bf16.msra.mxu0 %v639
  %651 = vmatprep.subr.bf16.mxu0 0
  %652 = vmatpush1.bf16.msra.mxu0 %v640
  %653 = vmatprep.subr.bf16.mxu0 0
  %654 = vmatpush1.bf16.msra.mxu0 %v641
  %655 = vmatprep.subr.bf16.mxu0 0
  %656 = vmatpush1.bf16.msra.mxu0 0
  %657 = vmatprep.subr.bf16.mxu0 0
  %658 = vmatpush1.bf16.msra.mxu0 0
  %659 = vmatprep.subr.bf16.mxu0 0
  %660 = vmatpush1.bf16.msra.mxu0 0
  %661 = vmatprep.subr.bf16.mxu0 0
  %662 = vmatpush1.bf16.msra.mxu0 0
  %663 = vmatprep.subr.bf16.mxu0 0
  %664 = vmatpush1.bf16.msra.mxu0 0
  %665 = vmatprep.subr.bf16.mxu0 0
  %666 = vmatpush1.bf16.msra.mxu0 0
  %667 = vmatprep.subr.bf16.mxu0 0
  %668 = vmatpush1.bf16.msra.mxu0 0
  %669 = vmatprep.subr.bf16.mxu0 0
  %670 = vmatpush1.bf16.msra.mxu0 0
  %671 = vmatprep.subr.bf16.mxu0 0
  %672 = vmatpush1.bf16.msra.mxu0 0
  %673 = vmatprep.subr.bf16.mxu0 0
  %674 = vmatpush1.bf16.msra.mxu0 0
  %675 = vmatprep.subr.bf16.mxu0 0
  %676 = vmatpush1.bf16.msra.mxu0 0
  %677 = vmatprep.subr.bf16.mxu0 0
  %678 = vmatpush1.bf16.msra.mxu0 0
  %679 = vmatprep.subr.bf16.mxu0 0
  %680 = vmatpush1.bf16.msra.mxu0 0
  %681 = vmatprep.mubr.bf16.mxu0 0
  %682 = vmatmul.mubr.bf16.gmra.mrb[0].mxu0 %v647
  %v683 = vpop.f32.mrb[0].mxu0
  %v684 = vadd.f32 %v622, %v683
  %v685 = vpop.f32.mrb[0].mxu0
  %v686 = vpop.f32.mrb[0].mxu0
  %v687 = vpop.f32.mrb[0].mxu0
  %688 = vdwg.mxu0
  %v689 = vld [vmem:[%s7] sm:$0x1]
  %v691 = vlaneseq
  %v692 = vshrl.u32 %v691, 7
  %v693 = vsub.s32 0, %v692
  %v694 = vrot.slane %v689, %v693
  %v696 = vadd.f32 %v684, %v694
  %697 = vst [vmem:[%s8] sm:$0x3] %v696
  // Predicated region
  $region34: #{cnn_forward.1} parent=0 // pred_check
    _
  $region35: #{cnn_forward.1} parent=0 // pred_check_branch
    %699 = sbr.rel (0) target = $region37
  $region36: #{cnn_forward.1} parent=0 // pred_region
    _
  $region37: #{cnn_forward.1} parent=0 // pred_fallthru
    _
  // Predicated region
  $region38: #{cnn_forward.1} parent=0 // pred_check
    _
  $region39: #{cnn_forward.1} parent=0 // pred_check_branch
    %701 = sbr.rel (0) target = $region41
  $region40: #{cnn_forward.1} parent=0 // pred_region
    _
  $region41: #{cnn_forward.1} parent=0 // pred_fallthru
    _

</llo_original>
